<compile_context>
chip_gen: v6e
topology: v6e:2x2x1
jax: 0.10.0
libtpu: 0.0.40
codegen_flags: <defaults>
</compile_context>

<pallas_src>
import functools

import jax
import jax.numpy as jnp
from jax.experimental import pallas as pl
from jax.experimental.pallas import tpu as pltpu

_R = 1.0
_S = 10.0

# ~2 MiB per tile keeps the pipeline at the HBM roofline without stressing VMEM.
_TARGET_TILE_BYTES = 2 * 1024 * 1024


def _scalar_kernel(x_ref, o_ref, *, r, s):
    x = x_ref[...]
    o_ref[...] = (x + jnp.asarray(r, x.dtype)) * jnp.asarray(s, x.dtype)


def _choose_lanes(n):
    # Widest power-of-two lane count (multiple of 128) dividing n.
    for cand in (2048, 1024, 512, 256, 128):
        if n % cand == 0:
            return cand
    return 128  # caller pads to a multiple of 128


def _run_slab(slab, r, s):
    rows, lanes = slab.shape
    dt = slab.dtype
    itemsize = jnp.dtype(dt).itemsize

    # Row tile: multiple of 8 sublanes, ~2 MiB, clamped to the slab height.
    tile_rows = (_TARGET_TILE_BYTES // (lanes * itemsize)) // 8 * 8
    tile_rows = max(8, tile_rows)
    if tile_rows >= rows:
        tile_rows = rows  # full-extent block (always legal, even if rows < 8)

    grid = (pl.cdiv(rows, tile_rows),)  # partial last block handled by Pallas

    kernel = functools.partial(_scalar_kernel, r=float(r), s=float(s))

    return pl.pallas_call(
        kernel,
        out_shape=jax.ShapeDtypeStruct((rows, lanes), dt),
        grid=grid,
        in_specs=[pl.BlockSpec((tile_rows, lanes), lambda i: (i, 0))],
        out_specs=pl.BlockSpec((tile_rows, lanes), lambda i: (i, 0)),
        compiler_params=pltpu.CompilerParams(
            dimension_semantics=("parallel",),
        ),
    )(slab)


def custom_scalar(x, r=_R, s=_S):
    """Elementwise (x + r) * s via a Pallas TPU kernel."""
    n = x.size
    if n == 0:
        return x

    flat = x.reshape(-1)
    lanes = _choose_lanes(n)

    if n % lanes != 0:
        # Rare misaligned case: pad once to a lane boundary so the kernel sees
        # an (8,128)-legal slab, then slice the result back.
        padded_n = pl.cdiv(n, lanes) * lanes
        flat_in = jnp.pad(flat, (0, padded_n - n))
    else:
        padded_n = n
        flat_in = flat

    rows = padded_n // lanes
    out = _run_slab(flat_in.reshape(rows, lanes), r, s)
    out_flat = out.reshape(-1)
    if padded_n != n:
        out_flat = out_flat[:n]
    return out_flat.reshape(x.shape)


class ModelMy:
    """JAX/Pallas equivalent of PyTorch Model_my (CustomScalar(r=1, s=10))."""

    def __init__(self):
        self.r = 1.0
        self.s = 10.0

    def __call__(self, x):
        return custom_scalar(x, self.r, self.s)


if __name__ == "__main__":
    key = jax.random.PRNGKey(0)
    model = ModelMy()

    # Small NCHW input matching the PyTorch module's typical usage.
    x = jax.random.normal(key, (2, 4, 16, 16), dtype=jnp.float32)

    y = jax.block_until_ready(model(x))

    ref = (x + 1.0) * 10.0
    assert y.shape == x.shape and y.dtype == x.dtype
    assert jnp.allclose(y, ref, atol=1e-5, rtol=1e-5)

    print("KERNEL_OK")
</pallas_src>

<mosaic_0001>
module attributes {stable_mosaic.version = 11 : i64} {
  func.func @_scalar_kernel(%arg0: i32, %arg1: memref<1x2048xf32, #tpu.memory_space<vmem>>, %arg2: memref<1x2048xf32, #tpu.memory_space<vmem>>) attributes {dimension_semantics = [#tpu.dimension_semantics<parallel>], iteration_bounds = array<i64: 1>, scalar_prefetch = 0 : i64, scratch_operands = 0 : i64, tpu.core_type = #tpu.core_type<tc>, window_params = [{transform_indices = @transform_0, window_bounds = array<i64: 1, 2048>}, {transform_indices = @transform_1, window_bounds = array<i64: 1, 2048>}]} {
    %c0 = arith.constant 0 : index
    %c0_0 = arith.constant 0 : index
    %0 = vector.load %arg1[%c0, %c0_0] : memref<1x2048xf32, #tpu.memory_space<vmem>>, vector<1x2048xf32>
    %cst = arith.constant 1.000000e+00 : f32
    %1 = vector.broadcast %cst : f32 to vector<1x2048xf32>
    %2 = arith.addf %0, %1 : vector<1x2048xf32>
    %cst_1 = arith.constant 1.000000e+01 : f32
    %3 = vector.broadcast %cst_1 : f32 to vector<1x2048xf32>
    %4 = arith.mulf %2, %3 : vector<1x2048xf32>
    %c0_2 = arith.constant 0 : index
    %c0_3 = arith.constant 0 : index
    %5 = vector.load %arg2[%c0_2, %c0_3] : memref<1x2048xf32, #tpu.memory_space<vmem>>, vector<1x2048xf32>
    tpu.vector_store %arg2[%c0_2, %c0_3], %4 {strides = array<i32>} : memref<1x2048xf32, #tpu.memory_space<vmem>>, vector<1x2048xf32>,
    return
  }
  func.func @transform_0(%arg0: i32) -> (i32, i32) {
    %c0_i32 = arith.constant 0 : i32
    %c0_i32_0 = arith.constant 0 : i32
    return %arg0, %c0_i32 : i32, i32
  }
  func.func @transform_1(%arg0: i32) -> (i32, i32) {
    %c0_i32 = arith.constant 0 : i32
    %c0_i32_0 = arith.constant 0 : i32
    return %arg0, %c0_i32 : i32, i32
  }
}

</mosaic_0001>

<llo_original>
// kernel: tpu_custom_call.1
$region0: #{tpu_custom_call.1}
  #allocation0 [shape = 'u32[]', space=smem, size = 0x4, offset = 0x4, fixed_abs, tag = 'smem constant byte address 0x4 - core index']
  #allocation1 [shape = 'u32[144,128]{1,0:T(1,128)}', space=vmem, size = 0x12000, scoped, tag = 'internal scratch']
  %s0 = inlined_call_operand.hbm [shape: f32[1,2048], index: 0, kind: input, shape index: {}]
  %s1 = inlined_call_operand.hbm [shape: f32[1,2048], index: 1, kind: output, shape index: {}]
  %s2 = sld [smem:[#allocation0]]
  $region18: #{tpu_custom_call.1} parent=0
    _
  %s4 = ssub.s32 1, %s2
  %s5 = scalar_select 0, %s4, %s2
  $region1: #{tpu_custom_call.1} parent=0
    #allocation2 [shape = 'u8[8192]{0}', space=vmem, size = 0x2000, scoped, tag = 'input window, operand 0, single buffered']
    #allocation3 [shape = 's32[1]{0}', space=sflag, size = 0x4, scoped, tag = 'scoped memory for tpu_custom_call.1']
    #allocation4 [shape = 's32[1]{0}', space=sflag, size = 0x4, scoped, tag = 'scoped memory for tpu_custom_call.1']
    #allocation5 [shape = 'u8[8192]{0}', space=vmem, size = 0x2000, scoped, tag = 'output window, operand 0, single buffered']
    %6 = vsyncpa [#allocation3], 0
    %7 = vsyncpa [#allocation4], 0
    // Predicated region
    $region2: #{tpu_custom_call.1} parent=1 // pred_check
      _
    $region3: #{tpu_custom_call.1} parent=1 // pred_check_branch
      %9 = sbr.rel (0) target = $region5
    $region4: #{tpu_custom_call.1} parent=1 // pred_region
      %s11 = ssub.s32 256, 256
      %12 = vsyncadd [#allocation3], %s11
      %s14 = sshll.u32 [#allocation2], 4
      %s15 = int_to_ptr.vmem [resolvable:$true] %s14
      %17 = dma.hbm_to_vmem [thread:$0]  %s0, 256, %s15, [#allocation3]
    $region5: #{tpu_custom_call.1} parent=1 // pred_fallthru
      _
    // Predicated region
    $region6: #{tpu_custom_call.1} parent=1 // pred_check
      _
    $region7: #{tpu_custom_call.1} parent=1 // pred_check_branch
      %19 = sbr.rel (0) target = $region9
    $region8: #{tpu_custom_call.1} parent=1 // pred_region
      %20 = dma.done [#allocation3], 256
    $region9: #{tpu_custom_call.1} parent=1 // pred_fallthru
      _
    %v21 = vld [vmem:[#allocation2] sm:$0xff]
    %v22 = vld [vmem:[#allocation2 + $0x8] sm:$0xff]
    %v23 = vadd.f32 %v21, 1.0
    %v24 = vadd.f32 %v22, 1.0
    %v25 = vmul.f32 %v23, 10.0
    %v26 = vmul.f32 %v24, 10.0
    %27 = vst [vmem:[#allocation5] sm:$0xff] %v25
    %28 = vst [vmem:[#allocation5 + $0x8] sm:$0xff] %v26
    // Predicated region
    $region10: #{tpu_custom_call.1} parent=1 // pred_check
      _
    $region11: #{tpu_custom_call.1} parent=1 // pred_check_branch
      %30 = sbr.rel (0) target = $region13
    $region12: #{tpu_custom_call.1} parent=1 // pred_region
      %s32 = ssub.s32 256, 256
      %33 = vsyncadd [#allocation4], %s32
      %s35 = sshll.u32 [#allocation5], 4
      %s36 = int_to_ptr.vmem [resolvable:$true] %s35
      %38 = dma.vmem_to_hbm [thread:$0]  %s36, 256, %s1, [#allocation4]
    $region13: #{tpu_custom_call.1} parent=1 // pred_fallthru
      _
    // Predicated region
    $region14: #{tpu_custom_call.1} parent=1 // pred_check
      _
    $region15: #{tpu_custom_call.1} parent=1 // pred_check_branch
      %40 = sbr.rel (0) target = $region17
    $region16: #{tpu_custom_call.1} parent=1 // pred_region
      %41 = dma.done [#allocation4], 256
    $region17: #{tpu_custom_call.1} parent=1 // pred_fallthru
      _
    %42 = vsyncpa [#allocation3], 1
    %43 = vsyncpa [#allocation4], 1

</llo_original>
